<compile_context>
chip_gen: v7x
topology: tpu7x:2x2x1
jax: 0.10.0
libtpu: 0.0.40
codegen_flags: <defaults>
</compile_context>

<pallas_src>
import functools

import jax
import jax.numpy as jnp
from jax.experimental import pallas as pl
from jax.experimental.pallas import tpu as pltpu


def _round_up(x: int, m: int) -> int:
    return ((x + m - 1) // m) * m


def _pad_cols(a, n_cols):
    pad = n_cols - a.shape[-1]
    return a if pad == 0 else jnp.pad(a, ((0, 0), (0, pad)))


def prepare_params(ws, bs, wa, ba, *, dtype=jnp.float32):
    """Pad/fuse parameters ONCE (per param update / at load time).

    ws : (state_dim, hidden)   -- transposed vs. torch Linear's (out, in) layout
    wa : (action_dim, hidden)
    bs, ba : (hidden,) or (1, hidden)

    Returns lane-padded params (hidden -> round_up(hidden, 128)) in `dtype`.
    Use dtype=jnp.bfloat16 for ~2x less weight/activation HBM traffic; the
    kernel always accumulates in f32.
    """
    hidden = ws.shape[1]
    h_pad = _round_up(hidden, 128)
    ws_p = _pad_cols(ws.astype(dtype), h_pad)
    wa_p = _pad_cols(wa.astype(dtype), h_pad)
    bs_p = _pad_cols(jnp.reshape(bs, (1, -1)).astype(dtype), h_pad)
    ba_p = _pad_cols(jnp.reshape(ba, (1, -1)).astype(dtype), h_pad)
    return ws_p, wa_p, bs_p, ba_p


def _fc_body_kernel(x_ref, a_ref, ws_ref, wa_ref, bs_ref, ba_ref, o_ref):
    """Two small GEMMs (fc_s, fc_a) -> bias -> ReLU -> two lane-dense stores."""
    h_pad = ws_ref.shape[1]
    s = jnp.dot(x_ref[...], ws_ref[...], preferred_element_type=jnp.float32)
    o_ref[:, :h_pad] = jnp.maximum(s + bs_ref[...], 0.0).astype(o_ref.dtype)
    a = jnp.dot(a_ref[...], wa_ref[...], preferred_element_type=jnp.float32)
    o_ref[:, h_pad:] = jnp.maximum(a + ba_ref[...], 0.0).astype(o_ref.dtype)


@functools.partial(jax.jit, static_argnames=("hidden", "tile_m", "min_tiles"))
def one_layer_fc_body_with_action(x, action, ws_p, wa_p, bs_p, ba_p, *,
                                  hidden, tile_m=1024, min_tiles=1):
    """Pallas-backed forward. Returns (B, 2*hidden) in the params' dtype.

    x      : (B, state_dim)
    action : (B, action_dim)
    ws_p, wa_p, bs_p, ba_p : outputs of prepare_params()
    hidden : original (unpadded) hidden width            [static]
    tile_m : max rows per batch tile                     [static]
    min_tiles : set to 2 on v7x so both TensorCores get work  [static]
    """
    B, S = x.shape
    A = action.shape[1]
    h_pad = ws_p.shape[1]
    dtype = ws_p.dtype

    x = x.astype(dtype)
    action = action.astype(dtype)

    # ---- Balanced batch tiling (multiples of 8 rows, ~equal-size tiles). ----
    nt = max(-(-B // tile_m), min(min_tiles, max(1, B // 8)))
    tm = _round_up(-(-B // nt), 8)
    nt = -(-B // tm)
    b_pad = nt * tm
    if b_pad != B:  # cheap row-only padding (no column concat/pad of activations)
        x = jnp.pad(x, ((0, b_pad - B), (0, 0)))
        action = jnp.pad(action, ((0, b_pad - B), (0, 0)))

    # ---- Explicit VMEM budget (double-buffered tiles + resident params). ----
    itemsize = jnp.dtype(dtype).itemsize
    act_bytes = 2 * tm * (S + A) * itemsize
    out_bytes = 2 * tm * 2 * h_pad * itemsize
    par_bytes = 2 * (S + A + 2) * h_pad * itemsize
    vmem_limit = int(min(64 * 2 ** 20,
                         max(2 * (act_bytes + out_bytes + par_bytes), 16 * 2 ** 20)))

    out_padded = pl.pallas_call(
        _fc_body_kernel,
        out_shape=jax.ShapeDtypeStruct((b_pad, 2 * h_pad), dtype),
        grid_spec=pltpu.PrefetchScalarGridSpec(
            num_scalar_prefetch=0,
            grid=(nt,),
            in_specs=[
                pl.BlockSpec((tm, S), lambda i: (i, 0)),       # x row tile
                pl.BlockSpec((tm, A), lambda i: (i, 0)),       # action row tile
                pl.BlockSpec((S, h_pad), lambda i: (0, 0)),    # Ws (resident)
                pl.BlockSpec((A, h_pad), lambda i: (0, 0)),    # Wa (resident)
                pl.BlockSpec((1, h_pad), lambda i: (0, 0)),    # bs
                pl.BlockSpec((1, h_pad), lambda i: (0, 0)),    # ba
            ],
            out_specs=pl.BlockSpec((tm, 2 * h_pad), lambda i: (i, 0)),
        ),
        compiler_params=pltpu.CompilerParams(
            dimension_semantics=("parallel",),   # batch tiles shard across TCs (v7x)
            vmem_limit_bytes=vmem_limit,
        ),
    )(x, action, ws_p, wa_p, bs_p, ba_p)

    # ---- Strip padding (no-op / elided when hidden % 128 == 0 and B % tm == 0). ----
    if h_pad == hidden:
        return out_padded if b_pad == B else out_padded[:B]
    # TODO(synk): for non-128-multiple hidden a consumer could accept the padded
    # (b_pad, 2*h_pad) layout directly and skip this copy.
    return jnp.concatenate(
        [out_padded[:B, :hidden], out_padded[:B, h_pad:h_pad + hidden]], axis=1)


def _reference(x, action, ws, bs, wa, ba):
    s = x @ ws + bs
    a = action @ wa + ba
    return jnp.maximum(jnp.concatenate([s, a], axis=1), 0.0)


if __name__ == "__main__":
    # Small, deterministic problem sizes consistent with the module.
    batch = 2
    state_dim = 16
    action_dim = 8
    hidden_units = 32

    key = jax.random.PRNGKey(0)
    k_x, k_a, k_ws, k_wa = jax.random.split(key, 4)

    x = jax.random.normal(k_x, (batch, state_dim), dtype=jnp.float32)
    action = jax.random.normal(k_a, (batch, action_dim), dtype=jnp.float32)

    # Deterministic synthetic parameters (layer_init in the original uses an
    # orthogonal init with zero bias; weights here are synthetic, not a checkpoint).
    ws = 0.1 * jax.random.normal(k_ws, (state_dim, hidden_units), dtype=jnp.float32)
    wa = 0.1 * jax.random.normal(k_wa, (action_dim, hidden_units), dtype=jnp.float32)
    bs = jnp.zeros((1, hidden_units), dtype=jnp.float32)
    ba = jnp.zeros((1, hidden_units), dtype=jnp.float32)

    # Pad/fuse parameters ONCE (not per forward call).
    ws_p, wa_p, bs_p, ba_p = prepare_params(ws, bs, wa, ba, dtype=jnp.float32)

    out = one_layer_fc_body_with_action(
        x, action, ws_p, wa_p, bs_p, ba_p, hidden=hidden_units)
    out = jax.block_until_ready(out)

    ref = _reference(x, action, ws, bs, wa, ba)
    assert out.shape == (batch, 2 * hidden_units)
    assert out.dtype == jnp.float32
    assert jnp.allclose(out, ref, atol=1e-5, rtol=1e-5)

    print("KERNEL_OK")
</pallas_src>

<mosaic_0001>
module attributes {stable_mosaic.version = 11 : i64} {
  func.func @_fc_body_kernel(%arg0: i32, %arg1: memref<8x16xf32, #tpu.memory_space<vmem>>, %arg2: memref<8x8xf32, #tpu.memory_space<vmem>>, %arg3: memref<16x128xf32, #tpu.memory_space<vmem>>, %arg4: memref<8x128xf32, #tpu.memory_space<vmem>>, %arg5: memref<1x128xf32, #tpu.memory_space<vmem>>, %arg6: memref<1x128xf32, #tpu.memory_space<vmem>>, %arg7: memref<8x256xf32, #tpu.memory_space<vmem>>) attributes {dimension_semantics = [#tpu.dimension_semantics<parallel>], iteration_bounds = array<i64: 1>, scalar_prefetch = 0 : i64, scratch_operands = 0 : i64, tpu.core_type = #tpu.core_type<tc>, window_params = [{transform_indices = @transform_0, window_bounds = array<i64: 8, 16>}, {transform_indices = @transform_1, window_bounds = array<i64: 8, 8>}, {pipeline_mode = #tpu.pipeline_mode<synchronous>, transform_indices = @transform_2, window_bounds = array<i64: 16, 128>}, {pipeline_mode = #tpu.pipeline_mode<synchronous>, transform_indices = @transform_3, window_bounds = array<i64: 8, 128>}, {pipeline_mode = #tpu.pipeline_mode<synchronous>, transform_indices = @transform_4, window_bounds = array<i64: 1, 128>}, {pipeline_mode = #tpu.pipeline_mode<synchronous>, transform_indices = @transform_5, window_bounds = array<i64: 1, 128>}, {transform_indices = @transform_6, window_bounds = array<i64: 8, 256>}]} {
    %c0 = arith.constant 0 : index
    %c0_0 = arith.constant 0 : index
    %0 = vector.load %arg1[%c0, %c0_0] : memref<8x16xf32, #tpu.memory_space<vmem>>, vector<8x16xf32>
    %c0_1 = arith.constant 0 : index
    %c0_2 = arith.constant 0 : index
    %1 = vector.load %arg3[%c0_1, %c0_2] : memref<16x128xf32, #tpu.memory_space<vmem>>, vector<16x128xf32>
    %cst = arith.constant dense<0.000000e+00> : vector<8x128xf32>
    %2 = tpu.matmul %0, %1, %cst {dimension_numbers = #tpu.dot_dimension_numbers<[1], [0], [0], [1], [0, 0, 1, 1], [], []>} : vector<8x16xf32>, vector<16x128xf32>, vector<8x128xf32> -> vector<8x128xf32>
    %c0_3 = arith.constant 0 : index
    %c0_4 = arith.constant 0 : index
    %3 = vector.load %arg5[%c0_3, %c0_4] : memref<1x128xf32, #tpu.memory_space<vmem>>, vector<1x128xf32>
    %4 = vector.broadcast %3 : vector<1x128xf32> to vector<8x128xf32>
    %5 = arith.addf %2, %4 : vector<8x128xf32>
    %cst_5 = arith.constant 0.000000e+00 : f32
    %6 = vector.broadcast %cst_5 : f32 to vector<8x128xf32>
    %7 = arith.maximumf %5, %6 : vector<8x128xf32>
    %c0_6 = arith.constant 0 : index
    %c0_7 = arith.constant 0 : index
    %8 = vector.load %arg7[%c0_6, %c0_7] : memref<8x256xf32, #tpu.memory_space<vmem>>, vector<8x128xf32>
    tpu.vector_store %arg7[%c0_6, %c0_7], %7 {strides = array<i32>} : memref<8x256xf32, #tpu.memory_space<vmem>>, vector<8x128xf32>,
    %c0_8 = arith.constant 0 : index
    %c0_9 = arith.constant 0 : index
    %9 = vector.load %arg2[%c0_8, %c0_9] : memref<8x8xf32, #tpu.memory_space<vmem>>, vector<8x8xf32>
    %c0_10 = arith.constant 0 : index
    %c0_11 = arith.constant 0 : index
    %10 = vector.load %arg4[%c0_10, %c0_11] : memref<8x128xf32, #tpu.memory_space<vmem>>, vector<8x128xf32>
    %cst_12 = arith.constant dense<0.000000e+00> : vector<8x128xf32>
    %11 = tpu.matmul %9, %10, %cst_12 {dimension_numbers = #tpu.dot_dimension_numbers<[1], [0], [0], [1], [0, 0, 1, 1], [], []>} : vector<8x8xf32>, vector<8x128xf32>, vector<8x128xf32> -> vector<8x128xf32>
    %c0_13 = arith.constant 0 : index
    %c0_14 = arith.constant 0 : index
    %12 = vector.load %arg6[%c0_13, %c0_14] : memref<1x128xf32, #tpu.memory_space<vmem>>, vector<1x128xf32>
    %13 = vector.broadcast %12 : vector<1x128xf32> to vector<8x128xf32>
    %14 = arith.addf %11, %13 : vector<8x128xf32>
    %cst_15 = arith.constant 0.000000e+00 : f32
    %15 = vector.broadcast %cst_15 : f32 to vector<8x128xf32>
    %16 = arith.maximumf %14, %15 : vector<8x128xf32>
    %c0_16 = arith.constant 0 : index
    %c128 = arith.constant 128 : index
    %17 = vector.load %arg7[%c0_16, %c128] : memref<8x256xf32, #tpu.memory_space<vmem>>, vector<8x128xf32>
    tpu.vector_store %arg7[%c0_16, %c128], %16 {strides = array<i32>} : memref<8x256xf32, #tpu.memory_space<vmem>>, vector<8x128xf32>,
    return
  }
  func.func @transform_0(%arg0: i32) -> (i32, i32) {
    %c0_i32 = arith.constant 0 : i32
    %c0_i32_0 = arith.constant 0 : i32
    return %arg0, %c0_i32 : i32, i32
  }
  func.func @transform_1(%arg0: i32) -> (i32, i32) {
    %c0_i32 = arith.constant 0 : i32
    %c0_i32_0 = arith.constant 0 : i32
    return %arg0, %c0_i32 : i32, i32
  }
  func.func @transform_2(%arg0: i32) -> (i32, i32) {
    %c0_i32 = arith.constant 0 : i32
    %c0_i32_0 = arith.constant 0 : i32
    %c0_i32_1 = arith.constant 0 : i32
    return %c0_i32, %c0_i32_0 : i32, i32
  }
  func.func @transform_3(%arg0: i32) -> (i32, i32) {
    %c0_i32 = arith.constant 0 : i32
    %c0_i32_0 = arith.constant 0 : i32
    %c0_i32_1 = arith.constant 0 : i32
    return %c0_i32, %c0_i32_0 : i32, i32
  }
  func.func @transform_4(%arg0: i32) -> (i32, i32) {
    %c0_i32 = arith.constant 0 : i32
    %c0_i32_0 = arith.constant 0 : i32
    %c0_i32_1 = arith.constant 0 : i32
    return %c0_i32, %c0_i32_0 : i32, i32
  }
  func.func @transform_5(%arg0: i32) -> (i32, i32) {
    %c0_i32 = arith.constant 0 : i32
    %c0_i32_0 = arith.constant 0 : i32
    %c0_i32_1 = arith.constant 0 : i32
    return %c0_i32, %c0_i32_0 : i32, i32
  }
  func.func @transform_6(%arg0: i32) -> (i32, i32) {
    %c0_i32 = arith.constant 0 : i32
    %c0_i32_0 = arith.constant 0 : i32
    return %arg0, %c0_i32 : i32, i32
  }
}

</mosaic_0001>

<llo_original>
// kernel: one_layer_fc_body_with_action.1
$region0: #{one_layer_fc_body_with_action.1}
  #allocation0 [shape = 'u32[]', space=smem, size = 0x4, offset = 0x4, fixed_abs, tag = 'smem constant byte address 0x4 - core index']
  #allocation1 [shape = 'u32[144,128]{1,0:T(1,128)}', space=vmem, size = 0x12000, scoped, tag = 'internal scratch']
  %s0 = inlined_call_operand.vmem [shape: f32[8,16], index: 0, kind: input, shape index: {}]
  %s1 = inlined_call_operand.vmem [shape: f32[8,8], index: 1, kind: input, shape index: {}]
  %s2 = inlined_call_operand.vmem [shape: f32[16,128], index: 2, kind: input, shape index: {}]
  %s3 = inlined_call_operand.vmem [shape: f32[8,128], index: 3, kind: input, shape index: {}]
  %s4 = inlined_call_operand.vmem [shape: f32[1,128], index: 4, kind: input, shape index: {}]
  %s5 = inlined_call_operand.vmem [shape: f32[1,128], index: 5, kind: input, shape index: {}]
  %s6 = inlined_call_operand.vmem [shape: f32[8,256], index: 6, kind: output, shape index: {}]
  %s7 = sld [smem:[#allocation0]]
  $region34: #{one_layer_fc_body_with_action.1} parent=0
    _
  %s9 = ssub.s32 1, %s7
  %s10 = scalar_select 0, %s9, %s7
  // Predicated region
  $region2: #{one_layer_fc_body_with_action.1} parent=0 // pred_check
    _
  $region3: #{one_layer_fc_body_with_action.1} parent=0 // pred_check_branch
    %12 = sbr.rel (0) target = $region5
  $region4: #{one_layer_fc_body_with_action.1} parent=0 // pred_region
    _
  $region5: #{one_layer_fc_body_with_action.1} parent=0 // pred_fallthru
    _
  // Predicated region
  $region6: #{one_layer_fc_body_with_action.1} parent=0 // pred_check
    _
  $region7: #{one_layer_fc_body_with_action.1} parent=0 // pred_check_branch
    %14 = sbr.rel (0) target = $region9
  $region8: #{one_layer_fc_body_with_action.1} parent=0 // pred_region
    _
  $region9: #{one_layer_fc_body_with_action.1} parent=0 // pred_fallthru
    _
  // Predicated region
  $region10: #{one_layer_fc_body_with_action.1} parent=0 // pred_check
    _
  $region11: #{one_layer_fc_body_with_action.1} parent=0 // pred_check_branch
    %16 = sbr.rel (0) target = $region13
  $region12: #{one_layer_fc_body_with_action.1} parent=0 // pred_region
    _
  $region13: #{one_layer_fc_body_with_action.1} parent=0 // pred_fallthru
    _
  // Predicated region
  $region14: #{one_layer_fc_body_with_action.1} parent=0 // pred_check
    _
  $region15: #{one_layer_fc_body_with_action.1} parent=0 // pred_check_branch
    %18 = sbr.rel (0) target = $region17
  $region16: #{one_layer_fc_body_with_action.1} parent=0 // pred_region
    _
  $region17: #{one_layer_fc_body_with_action.1} parent=0 // pred_fallthru
    _
  // Predicated region
  $region18: #{one_layer_fc_body_with_action.1} parent=0 // pred_check
    _
  $region19: #{one_layer_fc_body_with_action.1} parent=0 // pred_check_branch
    %20 = sbr.rel (0) target = $region21
  $region20: #{one_layer_fc_body_with_action.1} parent=0 // pred_region
    _
  $region21: #{one_layer_fc_body_with_action.1} parent=0 // pred_fallthru
    _
  // Predicated region
  $region22: #{one_layer_fc_body_with_action.1} parent=0 // pred_check
    _
  $region23: #{one_layer_fc_body_with_action.1} parent=0 // pred_check_branch
    %22 = sbr.rel (0) target = $region25
  $region24: #{one_layer_fc_body_with_action.1} parent=0 // pred_region
    _
  $region25: #{one_layer_fc_body_with_action.1} parent=0 // pred_fallthru
    _
  %v23 = vld [vmem:[%s0] sm:$0xff]
  %v24 = vld [vmem:[%s2] sm:$0xff]
  %v25 = vld [vmem:[%s2 + $0x8] sm:$0xff]
  %v26 = vld [vmem:[%s4] sm:$0x1]
  %v28 = vlaneseq
  %v29 = vshrl.u32 %v28, 7
  %v30 = vsub.s32 0, %v29
  %v31 = vrot.slane %v26, %v30
  %vm33 = vcmask 130048
  %v35 = vsel %vm33, %v23, 0
  %37 = vmatprep.subr.mxu0 0.0
  %38 = vmatpush1.msra.mxu0 %v24
  %39 = vmatprep.subr.mxu0 0.0
  %40 = vmatpush1.msra.mxu0 %v25
  %41 = vmatprep.subr.mxu0 0.0
  %42 = vmatpush1.msra.mxu0 0.0
  %43 = vmatprep.subr.mxu0 0.0
  %44 = vmatpush1.msra.mxu0 0.0
  %45 = vmatprep.subr.mxu0 0.0
  %46 = vmatpush1.msra.mxu0 0.0
  %47 = vmatprep.subr.mxu0 0.0
  %48 = vmatpush1.msra.mxu0 0.0
  %49 = vmatprep.subr.mxu0 0.0
  %50 = vmatpush1.msra.mxu0 0.0
  %51 = vmatprep.subr.mxu0 0.0
  %52 = vmatpush1.msra.mxu0 0.0
  %53 = vmatprep.subr.mxu0 0.0
  %54 = vmatpush1.msra.mxu0 0.0
  %55 = vmatprep.subr.mxu0 0.0
  %56 = vmatpush1.msra.mxu0 0.0
  %57 = vmatprep.subr.mxu0 0.0
  %58 = vmatpush1.msra.mxu0 0.0
  %59 = vmatprep.subr.mxu0 0.0
  %60 = vmatpush1.msra.mxu0 0.0
  %61 = vmatprep.subr.mxu0 0.0
  %62 = vmatpush1.msra.mxu0 0.0
  %63 = vmatprep.subr.mxu0 0.0
  %64 = vmatpush1.msra.mxu0 0.0
  %65 = vmatprep.subr.mxu0 0.0
  %66 = vmatpush1.msra.mxu0 0.0
  %67 = vmatprep.subr.mxu0 0.0
  %68 = vmatpush1.msra.mxu0 0.0
  %69 = vmatprep.subr.mxu0 0.0
  %70 = vmatpush1.msra.mxu0 0.0
  %71 = vmatprep.subr.mxu0 0.0
  %72 = vmatpush1.msra.mxu0 0.0
  %73 = vmatprep.subr.mxu0 0.0
  %74 = vmatpush1.msra.mxu0 0.0
  %75 = vmatprep.subr.mxu0 0.0
  %76 = vmatpush1.msra.mxu0 0.0
  %77 = vmatprep.subr.mxu0 0.0
  %78 = vmatpush1.msra.mxu0 0.0
  %79 = vmatprep.subr.mxu0 0.0
  %80 = vmatpush1.msra.mxu0 0.0
  %81 = vmatprep.subr.mxu0 0.0
  %82 = vmatpush1.msra.mxu0 0.0
  %83 = vmatprep.subr.mxu0 0.0
  %84 = vmatpush1.msra.mxu0 0.0
  %85 = vmatprep.subr.mxu0 0.0
  %86 = vmatpush1.msra.mxu0 0.0
  %87 = vmatprep.subr.mxu0 0.0
  %88 = vmatpush1.msra.mxu0 0.0
  %89 = vmatprep.subr.mxu0 0.0
  %90 = vmatpush1.msra.mxu0 0.0
  %91 = vmatprep.subr.mxu0 0.0
  %92 = vmatpush1.msra.mxu0 0.0
  %93 = vmatprep.subr.mxu0 0.0
  %94 = vmatpush1.msra.mxu0 0.0
  %95 = vmatprep.subr.mxu0 0.0
  %96 = vmatpush1.msra.mxu0 0.0
  %97 = vmatprep.subr.mxu0 0.0
  %98 = vmatpush1.msra.mxu0 0.0
  %99 = vmatprep.subr.mxu0 0.0
  %100 = vmatpush1.msra.mxu0 0.0
  %101 = vmatprep.mubr.f32.mxu0 0.0
  %102 = vmatmul.mubr.f32.gmra.mrb[0].mxu0 %v35
  %v103 = vpop.f32.mrb[0].mxu0
  %v104 = vadd.f32 %v31, %v103
  %v105 = vpop.f32.mrb[0].mxu0
  %106 = vdwg.mxu0
  %v107 = vmax.f32 %v104, 0.0
  %108 = vst [vmem:[%s6] sm:$0xff] %v107
  %v109 = vld [vmem:[%s1] sm:$0xff]
  %v110 = vld [vmem:[%s3] sm:$0xff]
  %v111 = vld [vmem:[%s5] sm:$0x1]
  %v113 = vlaneseq
  %v114 = vshrl.u32 %v113, 7
  %v115 = vsub.s32 0, %v114
  %v116 = vrot.slane %v111, %v115
  %vm118 = vcmask 64512
  %v120 = vsel %vm118, %v109, 0
  %122 = vmatprep.subr.mxu0 0.0
  %123 = vmatpush1.msra.mxu0 %v110
  %124 = vmatprep.subr.mxu0 0.0
  %125 = vmatpush1.msra.mxu0 0.0
  %126 = vmatprep.subr.mxu0 0.0
  %127 = vmatpush1.msra.mxu0 0.0
  %128 = vmatprep.subr.mxu0 0.0
  %129 = vmatpush1.msra.mxu0 0.0
  %130 = vmatprep.subr.mxu0 0.0
  %131 = vmatpush1.msra.mxu0 0.0
  %132 = vmatprep.subr.mxu0 0.0
  %133 = vmatpush1.msra.mxu0 0.0
  %134 = vmatprep.subr.mxu0 0.0
  %135 = vmatpush1.msra.mxu0 0.0
  %136 = vmatprep.subr.mxu0 0.0
  %137 = vmatpush1.msra.mxu0 0.0
  %138 = vmatprep.subr.mxu0 0.0
  %139 = vmatpush1.msra.mxu0 0.0
  %140 = vmatprep.subr.mxu0 0.0
  %141 = vmatpush1.msra.mxu0 0.0
  %142 = vmatprep.subr.mxu0 0.0
  %143 = vmatpush1.msra.mxu0 0.0
  %144 = vmatprep.subr.mxu0 0.0
  %145 = vmatpush1.msra.mxu0 0.0
  %146 = vmatprep.subr.mxu0 0.0
  %147 = vmatpush1.msra.mxu0 0.0
  %148 = vmatprep.subr.mxu0 0.0
  %149 = vmatpush1.msra.mxu0 0.0
  %150 = vmatprep.subr.mxu0 0.0
  %151 = vmatpush1.msra.mxu0 0.0
  %152 = vmatprep.subr.mxu0 0.0
  %153 = vmatpush1.msra.mxu0 0.0
  %154 = vmatprep.subr.mxu0 0.0
  %155 = vmatpush1.msra.mxu0 0.0
  %156 = vmatprep.subr.mxu0 0.0
  %157 = vmatpush1.msra.mxu0 0.0
  %158 = vmatprep.subr.mxu0 0.0
  %159 = vmatpush1.msra.mxu0 0.0
  %160 = vmatprep.subr.mxu0 0.0
  %161 = vmatpush1.msra.mxu0 0.0
  %162 = vmatprep.subr.mxu0 0.0
  %163 = vmatpush1.msra.mxu0 0.0
  %164 = vmatprep.subr.mxu0 0.0
  %165 = vmatpush1.msra.mxu0 0.0
  %166 = vmatprep.subr.mxu0 0.0
  %167 = vmatpush1.msra.mxu0 0.0
  %168 = vmatprep.subr.mxu0 0.0
  %169 = vmatpush1.msra.mxu0 0.0
  %170 = vmatprep.subr.mxu0 0.0
  %171 = vmatpush1.msra.mxu0 0.0
  %172 = vmatprep.subr.mxu0 0.0
  %173 = vmatpush1.msra.mxu0 0.0
  %174 = vmatprep.subr.mxu0 0.0
  %175 = vmatpush1.msra.mxu0 0.0
  %176 = vmatprep.subr.mxu0 0.0
  %177 = vmatpush1.msra.mxu0 0.0
  %178 = vmatprep.subr.mxu0 0.0
  %179 = vmatpush1.msra.mxu0 0.0
  %180 = vmatprep.subr.mxu0 0.0
  %181 = vmatpush1.msra.mxu0 0.0
  %182 = vmatprep.subr.mxu0 0.0
  %183 = vmatpush1.msra.mxu0 0.0
  %184 = vmatprep.subr.mxu0 0.0
  %185 = vmatpush1.msra.mxu0 0.0
  %186 = vmatprep.mubr.f32.mxu0 0.0
  %187 = vmatmul.mubr.f32.gmra.mrb[0].mxu0 %v120
  %v188 = vpop.f32.mrb[0].mxu0
  %v189 = vadd.f32 %v116, %v188
  %v190 = vpop.f32.mrb[0].mxu0
  %191 = vdwg.mxu0
  %v192 = vmax.f32 %v189, 0.0
  %193 = vst [vmem:[%s6 + $0x8] sm:$0xff] %v192
  // Predicated region
  $region26: #{one_layer_fc_body_with_action.1} parent=0 // pred_check
    _
  $region27: #{one_layer_fc_body_with_action.1} parent=0 // pred_check_branch
    %195 = sbr.rel (0) target = $region29
  $region28: #{one_layer_fc_body_with_action.1} parent=0 // pred_region
    _
  $region29: #{one_layer_fc_body_with_action.1} parent=0 // pred_fallthru
    _
  // Predicated region
  $region30: #{one_layer_fc_body_with_action.1} parent=0 // pred_check
    _
  $region31: #{one_layer_fc_body_with_action.1} parent=0 // pred_check_branch
    %197 = sbr.rel (0) target = $region33
  $region32: #{one_layer_fc_body_with_action.1} parent=0 // pred_region
    _
  $region33: #{one_layer_fc_body_with_action.1} parent=0 // pred_fallthru
    _

</llo_original>
